<compile_context>
chip_gen: v5e
topology: v5e:2x2
jax: 0.10.0
libtpu: 0.0.40
codegen_flags: <defaults>
</compile_context>

<pallas_src>
import numpy as np

import jax
import jax.numpy as jnp
from jax.experimental import pallas as pl
from jax.experimental.pallas import tpu as pltpu

TIMESTEPS = 1000  # default of GaussianDiffusion.__init__


# ----------------------------------------------------------------------------
# Beta schedule / diffusion buffers (plain numpy, float64 like torch, -> f32)
# ----------------------------------------------------------------------------
def sigmoid_beta_schedule_np(timesteps, start=-3, end=3, tau=1, clamp_min=1e-5):
    steps = timesteps + 1
    t = np.linspace(0, timesteps, steps, dtype=np.float64) / timesteps
    sig = lambda z: 1.0 / (1.0 + np.exp(-z))
    v_start = sig(start / tau)
    v_end = sig(end / tau)
    alphas_cumprod = (-sig((t * (end - start) + start) / tau) + v_end) / (v_end - v_start)
    alphas_cumprod = alphas_cumprod / alphas_cumprod[0]
    betas = 1.0 - alphas_cumprod[1:] / alphas_cumprod[:-1]
    return np.clip(betas, 0.0, 0.999)


def make_buffers(timesteps):
    betas = sigmoid_beta_schedule_np(timesteps)              # default 'sigmoid' schedule
    alphas = 1.0 - betas
    alphas_cumprod = np.cumprod(alphas, axis=0)
    snr = alphas_cumprod / (1.0 - alphas_cumprod)
    maybe_clipped_snr = snr.copy()                           # min_snr_loss_weight=False
    loss_weight = maybe_clipped_snr / snr                    # objective='pred_noise' -> 1.0
    return {
        "sqrt_alphas_cumprod": jnp.asarray(np.sqrt(alphas_cumprod), dtype=jnp.float32),
        "sqrt_one_minus_alphas_cumprod": jnp.asarray(
            np.sqrt(1.0 - alphas_cumprod), dtype=jnp.float32
        ),
        "loss_weight": jnp.asarray(loss_weight, dtype=jnp.float32),
    }


# ----------------------------------------------------------------------------
# Pallas kernel: (normalize + q_sample) -> denoiser -> weighted L1, HW-tiled
# ----------------------------------------------------------------------------
def diffusion_loss_kernel(c1_ref, c2_ref, sc_ref, aff_ref, wbig_ref,
                          img_ref, noise_ref, out_ref, acc_ref):
    # c1_ref, c2_ref, sc_ref, aff_ref : VMEM (B*C, 1)   per-row fused coefficients
    # wbig_ref                        : VMEM (B*C, B*C) block-diagonal 1x1-conv weight
    # img_ref, noise_ref              : VMEM (B*C, T)   lane-dense HW block
    # out_ref                         : VMEM (1, 128)   final loss (written last step)
    # acc_ref                         : VMEM (B*C, T)   f32 dense loss accumulator
    step = pl.program_id(0)

    @pl.when(step == 0)
    def _init():
        acc_ref[...] = jnp.zeros_like(acc_ref)

    img = img_ref[...]                        # raw image in [0, 1]
    nz = noise_ref[...]                       # gaussian noise == pred_noise target

    # auto_normalize + q_sample fused into one dense FMA pair:
    #   x_t = sa*(2*img - 1) + s1m*nz = c1*img + c2*nz - sa
    # (the "-sa" constant is folded through the 1x1 conv into aff).
    y = c1_ref[...] * img + c2_ref[...] * nz  # (B*C, T), full vreg occupancy

    # synthetic denoiser: per-batch 1x1 conv over channels expressed as ONE tiny
    # block-diagonal matmul (MXU slot is otherwise idle here), plus fused affine
    # (bias + time embedding - sa * row_sum(w)).
    model_out = jnp.dot(wbig_ref[...], y, preferred_element_type=jnp.float32) + aff_ref[...]

    # objective == 'pred_noise', loss_type == 'l1': weighted |model_out - noise|,
    # accumulated densely; single cross-lane reduce only in the finalize.
    acc_ref[...] += sc_ref[...] * jnp.abs(model_out - nz)

    @pl.when(step == pl.num_programs(0) - 1)
    def _finalize():
        out_ref[...] = jnp.zeros(out_ref.shape, jnp.float32) + jnp.sum(acc_ref[...])


def gaussian_diffusion_forward(img, t, noise, conv_w, model_params, buffers):
    """img, noise: (B, C, H, W) float32 NCHW. t: (B,) int32. Returns scalar loss."""
    B, C, H, W = img.shape
    HW = H * W
    BC = B * C
    assert HW % 128 == 0, "H*W must be a multiple of 128 for lane-dense tiling"

    # Free views: NCHW -> (B*C, HW); lane axis = HW, sublane axis = B*C.
    img_f = img.reshape(BC, HW)
    noise_f = noise.reshape(BC, HW)

    # extract(...) gathers done in JAX, folded into per-row coefficient columns.
    sa = buffers["sqrt_alphas_cumprod"][t]                    # (B,)
    s1m = buffers["sqrt_one_minus_alphas_cumprod"][t]         # (B,)
    lw = buffers["loss_weight"][t]                            # (B,)

    c1 = jnp.repeat(2.0 * sa, C).reshape(BC, 1).astype(jnp.float32)
    c2 = jnp.repeat(s1m, C).reshape(BC, 1).astype(jnp.float32)
    # per-batch L1 normalization and the batch mean folded into one scale
    sc = jnp.repeat(lw / float(B * C * HW), C).reshape(BC, 1).astype(jnp.float32)

    # fused per-row affine of the synthetic model: bias + (t/T)*tscale - sa*sum_ci w[co,ci]
    bias = model_params[0]                                    # (C,)
    tscale = model_params[1]                                  # (C,)
    tn = t.astype(jnp.float32) / float(TIMESTEPS)             # (B,)
    wsum = jnp.sum(conv_w, axis=1)                            # (C,)
    aff = (bias[None, :] + tn[:, None] * tscale[None, :]
           - sa[:, None] * wsum[None, :]).reshape(BC, 1).astype(jnp.float32)

    # block-diagonal weight: one tiny (BC, BC) matmul does every batch's channel mix
    wbig = jnp.kron(jnp.eye(B, dtype=jnp.float32), conv_w.astype(jnp.float32))  # (BC, BC)

    # HW tiling: largest multiple of 128 that divides HW, capped at 2048 lanes
    # (>=512-lane blocks reach ~85% of HBM roofline; blocks stay <=64 KiB so they
    # fit v5e's 16 MiB scoped default and v7x's 64 MiB VMEM with headroom).
    t_blk = HW
    for cand in (2048, 1024, 512, 256, 128):
        if HW % cand == 0:
            t_blk = cand
            break
    n_blk = HW // t_blk

    grid_spec = pltpu.PrefetchScalarGridSpec(
        num_scalar_prefetch=0,
        grid=(n_blk,),
        in_specs=[
            pl.BlockSpec((BC, 1), lambda i: (0, 0)),          # c1
            pl.BlockSpec((BC, 1), lambda i: (0, 0)),          # c2
            pl.BlockSpec((BC, 1), lambda i: (0, 0)),          # sc
            pl.BlockSpec((BC, 1), lambda i: (0, 0)),          # aff
            pl.BlockSpec((BC, BC), lambda i: (0, 0)),         # wbig
            pl.BlockSpec((BC, t_blk), lambda i: (0, i)),      # img (streamed)
            pl.BlockSpec((BC, t_blk), lambda i: (0, i)),      # noise (streamed)
        ],
        out_specs=pl.BlockSpec((1, 128), lambda i: (0, 0)),
        scratch_shapes=[pltpu.VMEM((BC, t_blk), jnp.float32)],
    )

    cost = pl.CostEstimate(
        flops=int(BC * HW * (4 + 2 * BC + 4)),
        transcendentals=0,
        bytes_accessed=int(2 * BC * HW * 4 + 4 * BC * 4 + BC * BC * 4 + 128 * 4),
    )

    out = pl.pallas_call(
        diffusion_loss_kernel,
        out_shape=jax.ShapeDtypeStruct((1, 128), jnp.float32),
        grid_spec=grid_spec,
        compiler_params=pltpu.CompilerParams(dimension_semantics=("arbitrary",)),
        cost_estimate=cost,
    )(c1, c2, sc, aff, wbig, img_f, noise_f)

    return out[0, 0]


# ----------------------------------------------------------------------------
# Pure-JAX reference of the same forward pass (for correctness check)
# ----------------------------------------------------------------------------
def reference_forward(img, t, noise, conv_w, model_params, buffers):
    B, C, H, W = img.shape
    sa = buffers["sqrt_alphas_cumprod"][t].reshape(B, 1, 1, 1)
    s1m = buffers["sqrt_one_minus_alphas_cumprod"][t].reshape(B, 1, 1, 1)
    lw = buffers["loss_weight"][t]
    x0 = img * 2.0 - 1.0
    x_t = sa * x0 + s1m * noise
    bias, tscale = model_params[0], model_params[1]
    tn = t.astype(jnp.float32) / float(TIMESTEPS)
    model_out = (jnp.einsum("oc,bchw->bohw", conv_w, x_t)
                 + bias[None, :, None, None]
                 + (tn[:, None] * tscale[None, :])[:, :, None, None])
    l1 = jnp.abs(model_out - noise).reshape(B, -1)
    return jnp.mean(l1 * lw[:, None])


if __name__ == "__main__":
    B, C, H, W = 2, 4, 16, 16

    key = jax.random.PRNGKey(0)
    k_img, k_t, k_noise, k_w, k_p = jax.random.split(key, 5)

    img = jax.random.uniform(k_img, (B, C, H, W), dtype=jnp.float32)        # in [0,1]
    t = jax.random.randint(k_t, (B,), 0, TIMESTEPS, dtype=jnp.int32)        # timesteps
    noise = jax.random.normal(k_noise, (B, C, H, W), dtype=jnp.float32)
    conv_w = jax.random.normal(k_w, (C, C), dtype=jnp.float32) * 0.1        # 1x1 conv
    model_params = jax.random.normal(k_p, (2, C), dtype=jnp.float32) * 0.1  # (bias, tscale)

    buffers = make_buffers(TIMESTEPS)

    loss = gaussian_diffusion_forward(img, t, noise, conv_w, model_params, buffers)
    loss = jax.block_until_ready(loss)
    ref = jax.block_until_ready(reference_forward(img, t, noise, conv_w, model_params, buffers))

    assert loss.shape == () and bool(jnp.isfinite(loss))
    np.testing.assert_allclose(np.asarray(loss), np.asarray(ref), rtol=1e-3, atol=1e-4)
    print("KERNEL_OK")
</pallas_src>

<mosaic_0001>
module attributes {stable_mosaic.version = 11 : i64} {
  func.func @diffusion_loss_kernel(%arg0: i32, %arg1: memref<8x1xf32, #tpu.memory_space<vmem>>, %arg2: memref<8x1xf32, #tpu.memory_space<vmem>>, %arg3: memref<8x1xf32, #tpu.memory_space<vmem>>, %arg4: memref<8x1xf32, #tpu.memory_space<vmem>>, %arg5: memref<8x8xf32, #tpu.memory_space<vmem>>, %arg6: memref<8x256xf32, #tpu.memory_space<vmem>>, %arg7: memref<8x256xf32, #tpu.memory_space<vmem>>, %arg8: memref<1x128xf32, #tpu.memory_space<vmem>>, %arg9: memref<8x256xf32, #tpu.memory_space<vmem>>) attributes {dimension_semantics = [#tpu.dimension_semantics<arbitrary>], iteration_bounds = array<i64: 1>, scalar_prefetch = 0 : i64, scratch_operands = 1 : i64, tpu.core_type = #tpu.core_type<tc>, window_params = [{pipeline_mode = #tpu.pipeline_mode<synchronous>, transform_indices = @transform_0, window_bounds = array<i64: 8, 1>}, {pipeline_mode = #tpu.pipeline_mode<synchronous>, transform_indices = @transform_1, window_bounds = array<i64: 8, 1>}, {pipeline_mode = #tpu.pipeline_mode<synchronous>, transform_indices = @transform_2, window_bounds = array<i64: 8, 1>}, {pipeline_mode = #tpu.pipeline_mode<synchronous>, transform_indices = @transform_3, window_bounds = array<i64: 8, 1>}, {pipeline_mode = #tpu.pipeline_mode<synchronous>, transform_indices = @transform_4, window_bounds = array<i64: 8, 8>}, {transform_indices = @transform_5, window_bounds = array<i64: 8, 256>}, {transform_indices = @transform_6, window_bounds = array<i64: 8, 256>}, {pipeline_mode = #tpu.pipeline_mode<synchronous>, transform_indices = @transform_7, window_bounds = array<i64: 1, 128>}]} {
    %c0_i32 = arith.constant 0 : i32
    %0 = arith.cmpi eq, %arg0, %c0_i32 : i32
    %1 = arith.extui %0 : i1 to i32
    %c0_i32_0 = arith.constant 0 : i32
    %2 = arith.cmpi ne, %1, %c0_i32_0 : i32
    scf.if %2 {
      %cst_20 = arith.constant 0.000000e+00 : f32
      %28 = vector.broadcast %cst_20 : f32 to vector<8x256xf32>
      %c0_21 = arith.constant 0 : index
      %c0_22 = arith.constant 0 : index
      %29 = vector.load %arg9[%c0_21, %c0_22] : memref<8x256xf32, #tpu.memory_space<vmem>>, vector<8x256xf32>
      tpu.vector_store %arg9[%c0_21, %c0_22], %28 {strides = array<i32>} : memref<8x256xf32, #tpu.memory_space<vmem>>, vector<8x256xf32>,
    } else {
    }
    %c0 = arith.constant 0 : index
    %c0_1 = arith.constant 0 : index
    %3 = vector.load %arg6[%c0, %c0_1] : memref<8x256xf32, #tpu.memory_space<vmem>>, vector<8x256xf32>
    %c0_2 = arith.constant 0 : index
    %c0_3 = arith.constant 0 : index
    %4 = vector.load %arg7[%c0_2, %c0_3] : memref<8x256xf32, #tpu.memory_space<vmem>>, vector<8x256xf32>
    %c0_4 = arith.constant 0 : index
    %c0_5 = arith.constant 0 : index
    %5 = vector.load %arg1[%c0_4, %c0_5] : memref<8x1xf32, #tpu.memory_space<vmem>>, vector<8x1xf32>
    %6 = vector.broadcast %5 : vector<8x1xf32> to vector<8x256xf32>
    %7 = arith.mulf %6, %3 : vector<8x256xf32>
    %c0_6 = arith.constant 0 : index
    %c0_7 = arith.constant 0 : index
    %8 = vector.load %arg2[%c0_6, %c0_7] : memref<8x1xf32, #tpu.memory_space<vmem>>, vector<8x1xf32>
    %9 = vector.broadcast %8 : vector<8x1xf32> to vector<8x256xf32>
    %10 = arith.mulf %9, %4 : vector<8x256xf32>
    %11 = arith.addf %7, %10 : vector<8x256xf32>
    %c0_8 = arith.constant 0 : index
    %c0_9 = arith.constant 0 : index
    %12 = vector.load %arg5[%c0_8, %c0_9] : memref<8x8xf32, #tpu.memory_space<vmem>>, vector<8x8xf32>
    %cst = arith.constant dense<0.000000e+00> : vector<8x256xf32>
    %13 = tpu.matmul %12, %11, %cst {dimension_numbers = #tpu.dot_dimension_numbers<[1], [0], [0], [1], [0, 0, 1, 1], [], []>} : vector<8x8xf32>, vector<8x256xf32>, vector<8x256xf32> -> vector<8x256xf32>
    %c0_10 = arith.constant 0 : index
    %c0_11 = arith.constant 0 : index
    %14 = vector.load %arg4[%c0_10, %c0_11] : memref<8x1xf32, #tpu.memory_space<vmem>>, vector<8x1xf32>
    %15 = vector.broadcast %14 : vector<8x1xf32> to vector<8x256xf32>
    %16 = arith.addf %13, %15 : vector<8x256xf32>
    %c0_12 = arith.constant 0 : index
    %c0_13 = arith.constant 0 : index
    %17 = vector.load %arg9[%c0_12, %c0_13] : memref<8x256xf32, #tpu.memory_space<vmem>>, vector<8x256xf32>
    %c0_14 = arith.constant 0 : index
    %c0_15 = arith.constant 0 : index
    %18 = vector.load %arg3[%c0_14, %c0_15] : memref<8x1xf32, #tpu.memory_space<vmem>>, vector<8x1xf32>
    %19 = arith.subf %16, %4 : vector<8x256xf32>
    %20 = math.absf %19 : vector<8x256xf32>
    %21 = vector.broadcast %18 : vector<8x1xf32> to vector<8x256xf32>
    %22 = arith.mulf %21, %20 : vector<8x256xf32>
    %23 = arith.addf %17, %22 : vector<8x256xf32>
    %c0_16 = arith.constant 0 : index
    %c0_17 = arith.constant 0 : index
    %24 = vector.load %arg9[%c0_16, %c0_17] : memref<8x256xf32, #tpu.memory_space<vmem>>, vector<8x256xf32>
    tpu.vector_store %arg9[%c0_16, %c0_17], %23 {strides = array<i32>} : memref<8x256xf32, #tpu.memory_space<vmem>>, vector<8x256xf32>,
    %c0_i32_18 = arith.constant 0 : i32
    %25 = arith.cmpi eq, %arg0, %c0_i32_18 : i32
    %26 = arith.extui %25 : i1 to i32
    %c0_i32_19 = arith.constant 0 : i32
    %27 = arith.cmpi ne, %26, %c0_i32_19 : i32
    scf.if %27 {
      %cst_20 = arith.constant 0.000000e+00 : f32
      %28 = vector.broadcast %cst_20 : f32 to vector<1x128xf32>
      %c0_21 = arith.constant 0 : index
      %c0_22 = arith.constant 0 : index
      %29 = vector.load %arg9[%c0_21, %c0_22] : memref<8x256xf32, #tpu.memory_space<vmem>>, vector<8x256xf32>
      %30 = vector.shape_cast %29 : vector<8x256xf32> to vector<1x8x256xf32>
      %cst_23 = arith.constant dense<0.000000e+00> : vector<1xf32>
      %31 = vector.multi_reduction <add>, %30, %cst_23 [1, 2] : vector<1x8x256xf32> to vector<1xf32>
      %32 = vector.shape_cast %31 : vector<1xf32> to vector<1x1x1xf32>
      %33 = vector.extract %32[0, 0, 0] : f32 from vector<1x1x1xf32>
      %34 = vector.broadcast %33 : f32 to vector<1x128xf32>
      %35 = arith.addf %28, %34 : vector<1x128xf32>
      %c0_24 = arith.constant 0 : index
      %c0_25 = arith.constant 0 : index
      %36 = vector.load %arg8[%c0_24, %c0_25] : memref<1x128xf32, #tpu.memory_space<vmem>>, vector<1x128xf32>
      tpu.vector_store %arg8[%c0_24, %c0_25], %35 {strides = array<i32>} : memref<1x128xf32, #tpu.memory_space<vmem>>, vector<1x128xf32>,
    } else {
    }
    return
  }
  func.func @transform_0(%arg0: i32) -> (i32, i32) {
    %c0_i32 = arith.constant 0 : i32
    %c0_i32_0 = arith.constant 0 : i32
    %c0_i32_1 = arith.constant 0 : i32
    return %c0_i32, %c0_i32_0 : i32, i32
  }
  func.func @transform_1(%arg0: i32) -> (i32, i32) {
    %c0_i32 = arith.constant 0 : i32
    %c0_i32_0 = arith.constant 0 : i32
    %c0_i32_1 = arith.constant 0 : i32
    return %c0_i32, %c0_i32_0 : i32, i32
  }
  func.func @transform_2(%arg0: i32) -> (i32, i32) {
    %c0_i32 = arith.constant 0 : i32
    %c0_i32_0 = arith.constant 0 : i32
    %c0_i32_1 = arith.constant 0 : i32
    return %c0_i32, %c0_i32_0 : i32, i32
  }
  func.func @transform_3(%arg0: i32) -> (i32, i32) {
    %c0_i32 = arith.constant 0 : i32
    %c0_i32_0 = arith.constant 0 : i32
    %c0_i32_1 = arith.constant 0 : i32
    return %c0_i32, %c0_i32_0 : i32, i32
  }
  func.func @transform_4(%arg0: i32) -> (i32, i32) {
    %c0_i32 = arith.constant 0 : i32
    %c0_i32_0 = arith.constant 0 : i32
    %c0_i32_1 = arith.constant 0 : i32
    return %c0_i32, %c0_i32_0 : i32, i32
  }
  func.func @transform_5(%arg0: i32) -> (i32, i32) {
    %c0_i32 = arith.constant 0 : i32
    %c0_i32_0 = arith.constant 0 : i32
    return %c0_i32, %arg0 : i32, i32
  }
  func.func @transform_6(%arg0: i32) -> (i32, i32) {
    %c0_i32 = arith.constant 0 : i32
    %c0_i32_0 = arith.constant 0 : i32
    return %c0_i32, %arg0 : i32, i32
  }
  func.func @transform_7(%arg0: i32) -> (i32, i32) {
    %c0_i32 = arith.constant 0 : i32
    %c0_i32_0 = arith.constant 0 : i32
    %c0_i32_1 = arith.constant 0 : i32
    return %c0_i32, %c0_i32_0 : i32, i32
  }
}

</mosaic_0001>

<llo_original>
// kernel: tpu_custom_call.1
$region0: #{tpu_custom_call.1}
  #allocation0 [shape = 'u32[]', space=smem, size = 0x4, offset = 0x4, fixed_abs, tag = 'smem constant byte address 0x4 - core index']
  #allocation1 [shape = 'u32[72,128]{1,0:T(1,128)}', space=vmem, size = 0x9000, scoped, tag = 'internal scratch']
  #allocation2 [shape = 'f32[8,256]{1,0:T(8,128)}', space=vmem, size = 0x2000, scoped, tag = 'scratch operand']
  %s0 = inlined_call_operand.vmem [shape: f32[8,1], index: 0, kind: input, shape index: {}]
  %s1 = inlined_call_operand.vmem [shape: f32[8,1], index: 1, kind: input, shape index: {}]
  %s2 = inlined_call_operand.vmem [shape: f32[8,1], index: 2, kind: input, shape index: {}]
  %s3 = inlined_call_operand.vmem [shape: f32[8,1], index: 3, kind: input, shape index: {}]
  %s4 = inlined_call_operand.hbm [shape: f32[8,8], index: 4, kind: input, shape index: {}]
  %s5 = inlined_call_operand.vmem [shape: f32[8,256], index: 5, kind: input, shape index: {}]
  %s6 = inlined_call_operand.vmem [shape: f32[8,256], index: 6, kind: input, shape index: {}]
  %s7 = inlined_call_operand.hbm [shape: f32[1,128], index: 7, kind: output, shape index: {}]
  %s8 = sld [smem:[#allocation0]]
  $region50: #{tpu_custom_call.1} parent=0
    _
  %s10 = ssub.s32 1, %s8
  %s11 = scalar_select 0, %s10, %s8
  $region1: #{tpu_custom_call.1} parent=0
    #allocation3 [shape = 'u8[4096]{0}', space=vmem, size = 0x1000, scoped, tag = 'input window, operand 4, single buffered']
    #allocation4 [shape = 's32[1]{0}', space=sflag, size = 0x4, scoped, tag = 'scoped memory for tpu_custom_call.1']
    #allocation5 [shape = 's32[1]{0}', space=sflag, size = 0x4, scoped, tag = 'scoped memory for tpu_custom_call.1']
    #allocation6 [shape = 'u8[512]{0}', space=vmem, size = 0x400, scoped, tag = 'output window, operand 0, single buffered']
    %12 = vsyncpa [#allocation4], 0
    %13 = vsyncpa [#allocation5], 0
    // Predicated region
    $region2: #{tpu_custom_call.1} parent=1 // pred_check
      _
    $region3: #{tpu_custom_call.1} parent=1 // pred_check_branch
      %15 = sbr.rel (0) target = $region5
    $region4: #{tpu_custom_call.1} parent=1 // pred_region
      _
    $region5: #{tpu_custom_call.1} parent=1 // pred_fallthru
      _
    // Predicated region
    $region6: #{tpu_custom_call.1} parent=1 // pred_check
      _
    $region7: #{tpu_custom_call.1} parent=1 // pred_check_branch
      %17 = sbr.rel (0) target = $region9
    $region8: #{tpu_custom_call.1} parent=1 // pred_region
      _
    $region9: #{tpu_custom_call.1} parent=1 // pred_fallthru
      _
    // Predicated region
    $region10: #{tpu_custom_call.1} parent=1 // pred_check
      _
    $region11: #{tpu_custom_call.1} parent=1 // pred_check_branch
      %19 = sbr.rel (0) target = $region13
    $region12: #{tpu_custom_call.1} parent=1 // pred_region
      _
    $region13: #{tpu_custom_call.1} parent=1 // pred_fallthru
      _
    // Predicated region
    $region14: #{tpu_custom_call.1} parent=1 // pred_check
      _
    $region15: #{tpu_custom_call.1} parent=1 // pred_check_branch
      %21 = sbr.rel (0) target = $region17
    $region16: #{tpu_custom_call.1} parent=1 // pred_region
      _
    $region17: #{tpu_custom_call.1} parent=1 // pred_fallthru
      _
    // Predicated region
    $region18: #{tpu_custom_call.1} parent=1 // pred_check
      _
    $region19: #{tpu_custom_call.1} parent=1 // pred_check_branch
      %23 = sbr.rel (0) target = $region21
    $region20: #{tpu_custom_call.1} parent=1 // pred_region
      %25 = vsyncadd [#allocation4], 0
      %s27 = sshll.u32 %s4, 4
      %s28 = int_to_ptr.hbm [resolvable:$true] %s27
      %s29 = sshll.u32 [#allocation3], 4
      %s30 = int_to_ptr.vmem [resolvable:$true] %s29
      %32 = dma.hbm_to_vmem [thread:$0]  %s28, 128, %s30, [#allocation4]
    $region21: #{tpu_custom_call.1} parent=1 // pred_fallthru
      _
    // Predicated region
    $region22: #{tpu_custom_call.1} parent=1 // pred_check
      _
    $region23: #{tpu_custom_call.1} parent=1 // pred_check_branch
      %34 = sbr.rel (0) target = $region25
    $region24: #{tpu_custom_call.1} parent=1 // pred_region
      _
    $region25: #{tpu_custom_call.1} parent=1 // pred_fallthru
      _
    // Predicated region
    $region26: #{tpu_custom_call.1} parent=1 // pred_check
      _
    $region27: #{tpu_custom_call.1} parent=1 // pred_check_branch
      %36 = sbr.rel (0) target = $region29
    $region28: #{tpu_custom_call.1} parent=1 // pred_region
      _
    $region29: #{tpu_custom_call.1} parent=1 // pred_fallthru
      _
    // Predicated region
    $region30: #{tpu_custom_call.1} parent=1 // pred_check
      _
    $region31: #{tpu_custom_call.1} parent=1 // pred_check_branch
      %38 = sbr.rel (0) target = $region33
    $region32: #{tpu_custom_call.1} parent=1 // pred_region
      %40 = dma.done [#allocation4], 128
    $region33: #{tpu_custom_call.1} parent=1 // pred_fallthru
      _
    %p41 = scmp.eq.s32.totalorder 0, 0
    // Predicated region
    $region34: #{tpu_custom_call.1} parent=1 // pred_check
      %p42 = pneg %p41
    $region35: #{tpu_custom_call.1} parent=1 // pred_check_branch
      %44 = sbr.rel (%p42) target = $region37
    $region36: #{tpu_custom_call.1} parent=1 // pred_region
      %45 = vst [vmem:[#allocation2] sm:$0xff] 0.0
      %46 = vst [vmem:[#allocation2 + $0x8] sm:$0xff] 0.0
    $region37: #{tpu_custom_call.1} parent=1 // pred_fallthru
      _
    %v47 = vld [vmem:[%s5] sm:$0xff]
    %v48 = vld [vmem:[%s5 + $0x8] sm:$0xff]
    %v49 = vld [vmem:[%s6] sm:$0xff]
    %v50 = vld [vmem:[%s6 + $0x8] sm:$0xff]
    %v51 = vld [vmem:[%s0] sm:$0xff]
    %53 = vset.pattern.permute.xlu0 0
    %54 = vperm.xlu0 %53, %v51
    %v55 = vpop.permute.xlu0 %54
    %v57 = vmul.f32 %v55, %v47
    %v58 = vmul.f32 %v55, %v48
    %v59 = vld [vmem:[%s1] sm:$0xff]
    %61 = vset.pattern.permute.xlu0 0
    %62 = vperm.xlu0 %61, %v59
    %v63 = vpop.permute.xlu0 %62
    %v65 = vmul.f32 %v63, %v49
    %v66 = vmul.f32 %v63, %v50
    %v67 = vadd.f32 %v57, %v65
    %v68 = vadd.f32 %v58, %v66
    %v69 = vld [vmem:[#allocation3] sm:$0xff]
    %v70 = vld [vmem:[%s3] sm:$0xff]
    %72 = vset.pattern.permute.xlu0 0
    %73 = vperm.xlu0 %72, %v70
    %v74 = vpop.permute.xlu0 %73
    %vm76 = vcmask 64512
    %v78 = vsel %vm76, %v69, 0
    %80 = vmatpush.msra.mxu0 0.0
    %81 = vmatpush.msra.mxu0 0.0
    %82 = vmatpush.msra.mxu0 0.0
    %83 = vmatpush.msra.mxu0 0.0
    %84 = vmatpush.msra.mxu0 0.0
    %85 = vmatpush.msra.mxu0 0.0
    %86 = vmatpush.msra.mxu0 0.0
    %87 = vmatpush.msra.mxu0 0.0
    %88 = vmatpush.msra.mxu0 0.0
    %89 = vmatpush.msra.mxu0 0.0
    %90 = vmatpush.msra.mxu0 0.0
    %91 = vmatpush.msra.mxu0 0.0
    %92 = vmatpush.msra.mxu0 0.0
    %93 = vmatpush.msra.mxu0 0.0
    %94 = vmatpush.msra.mxu0 0.0
    %95 = vmatpush.msra.mxu0 %v67
    %96 = vmatmul.f32.gmra.mxu0 %v78
    %v97 = vpop.f32.mrf.mxu0
    %v98 = vadd.f32 %v74, %v97
    %99 = vdwg.mxu0
    %100 = vmatpush.msra.mxu0 0.0
    %101 = vmatpush.msra.mxu0 0.0
    %102 = vmatpush.msra.mxu0 0.0
    %103 = vmatpush.msra.mxu0 0.0
    %104 = vmatpush.msra.mxu0 0.0
    %105 = vmatpush.msra.mxu0 0.0
    %106 = vmatpush.msra.mxu0 0.0
    %107 = vmatpush.msra.mxu0 0.0
    %108 = vmatpush.msra.mxu0 0.0
    %109 = vmatpush.msra.mxu0 0.0
    %110 = vmatpush.msra.mxu0 0.0
    %111 = vmatpush.msra.mxu0 0.0
    %112 = vmatpush.msra.mxu0 0.0
    %113 = vmatpush.msra.mxu0 0.0
    %114 = vmatpush.msra.mxu0 0.0
    %115 = vmatpush.msra.mxu0 %v68
    %116 = vmatmul.f32.gmra.mxu0 %v78
    %v117 = vpop.f32.mrf.mxu0
    %v118 = vadd.f32 %v74, %v117
    %119 = vdwg.mxu0
    %v120 = vld [vmem:[#allocation2] sm:$0xff]
    %v121 = vld [vmem:[#allocation2 + $0x8] sm:$0xff]
    %v122 = vld [vmem:[%s2] sm:$0xff]
    %v123 = vsub.f32 %v98, %v49
    %v124 = vsub.f32 %v118, %v50
    %v125 = vand.u32 2147483647, %v123
    %v126 = vand.u32 2147483647, %v124
    %128 = vset.pattern.permute.xlu0 0
    %129 = vperm.xlu0 %128, %v122
    %v130 = vpop.permute.xlu0 %129
    %v132 = vmul.f32 %v130, %v125
    %v133 = vmul.f32 %v130, %v126
    %v134 = vadd.f32 %v120, %v132
    %v135 = vadd.f32 %v121, %v133
    %136 = vst [vmem:[#allocation2] sm:$0xff] %v134
    %137 = vst [vmem:[#allocation2 + $0x8] sm:$0xff] %v135
    // Predicated region
    $region38: #{tpu_custom_call.1} parent=1 // pred_check
      %p138 = pneg %p41
    $region39: #{tpu_custom_call.1} parent=1 // pred_check_branch
      %140 = sbr.rel (%p138) target = $region41
    $region40: #{tpu_custom_call.1} parent=1 // pred_region
      %v141 = vld [vmem:[#allocation2] sm:$0xff]
      %v142 = vld [vmem:[#allocation2 + $0x8] sm:$0xff]
      %v143 = vadd.f32 %v141, %v142
      %144 = vadd.xlane.f32.xlu0 %v143
      %v145 = vpop.xlane.xlu0 %144
      %v146 = vrot.slane %v145, 4
      %v147 = vadd.f32 %v145, %v146
      %v148 = vrot.slane %v147, 2
      %v149 = vadd.f32 %v147, %v148
      %v150 = vrot.slane %v149, 1
      %v151 = vadd.f32 %v149, %v150
      %s152 = vtos %v151
      %v153 = vstv %s152
      %v154 = vadd.f32 %v153, 0.0
      %155 = vst [vmem:[#allocation6] sm:$0x1] %v154
    $region41: #{tpu_custom_call.1} parent=1 // pred_fallthru
      _
    // Predicated region
    $region42: #{tpu_custom_call.1} parent=1 // pred_check
      _
    $region43: #{tpu_custom_call.1} parent=1 // pred_check_branch
      %157 = sbr.rel (0) target = $region45
    $region44: #{tpu_custom_call.1} parent=1 // pred_region
      %159 = vsyncadd [#allocation5], 0
      %s161 = sshll.u32 [#allocation6], 4
      %s162 = int_to_ptr.vmem [resolvable:$true] %s161
      %s163 = sshll.u32 %s7, 4
      %s164 = int_to_ptr.hbm [resolvable:$true] %s163
      %166 = dma.vmem_to_hbm [thread:$0]  %s162, 16, %s164, [#allocation5]
    $region45: #{tpu_custom_call.1} parent=1 // pred_fallthru
      _
    // Predicated region
    $region46: #{tpu_custom_call.1} parent=1 // pred_check
      _
    $region47: #{tpu_custom_call.1} parent=1 // pred_check_branch
      %168 = sbr.rel (0) target = $region49
    $region48: #{tpu_custom_call.1} parent=1 // pred_region
      %170 = dma.done [#allocation5], 16
    $region49: #{tpu_custom_call.1} parent=1 // pred_fallthru
      _
    %171 = vsyncpa [#allocation4], 1
    %172 = vsyncpa [#allocation5], 1

</llo_original>
